<compile_context>
chip_gen: v6e
topology: v6e:2x2x1
jax: 0.10.0
libtpu: 0.0.40
codegen_flags: <defaults>
</compile_context>

<pallas_src>
import functools

import jax
import jax.numpy as jnp
from jax.experimental import pallas as pl
from jax.experimental.pallas import tpu as pltpu


def _fused_kernel(x_ref, wr_ref, br_ref, w1_ref, b1_ref, w2_ref, b2_ref, out_ref):
    # receiver: x, _ = receiver(input)  -> only the first tuple element is used.
    # K = D_in is tiny -> keep this matmul in f32 (accuracy, ~free on the MXU).
    h = jnp.tanh(
        jnp.dot(x_ref[...], wr_ref[...], preferred_element_type=jnp.float32)
        + br_ref[...]
    )                                                           # f32 (TB, H)

    # net: relu(h @ W1 + b1) @ W2 + b2 ; bf16 operands, f32 accumulation.
    y1 = jnp.maximum(
        jnp.dot(h.astype(jnp.bfloat16), w1_ref[...],
                preferred_element_type=jnp.float32) + b1_ref[...],
        0.0,
    )                                                           # f32 (TB, H2)
    out = (
        jnp.dot(y1.astype(jnp.bfloat16), w2_ref[...],
                preferred_element_type=jnp.float32) + b2_ref[...]
    )                                                           # f32 (TB, D_pad)
    out_ref[...] = out.astype(out_ref.dtype)


def _pick_tb(batch, tb_max):
    """Big tiles amortize per-grid-step overhead; keep >=2 tiles when the batch
    allows so the 'parallel' axis shards across both v7x TensorCores."""
    tb_max = max(128, (tb_max // 128) * 128)
    if batch <= 128:
        return 128                                   # one (possibly partial) tile
    half = ((batch + 255) // 256) * 128              # ~half the batch, 128-aligned
    return min(tb_max, half)


def prepare_params(params):
    """One-time setup: cast / lane-pad the weights so the per-call wrapper does
    zero extra XLA ops (no per-forward casts, zeros, or scatters)."""
    w2 = params["w2"]
    H2, d_out = w2.shape
    d_pad = max(128, ((d_out + 127) // 128) * 128)   # lane-dense output columns
    w2p = jnp.zeros((H2, d_pad), jnp.bfloat16).at[:, :d_out].set(
        w2.astype(jnp.bfloat16))
    b2p = jnp.zeros((1, d_pad), jnp.float32).at[:, :d_out].set(
        params["b2"].astype(jnp.float32))
    prep = {
        "wr": params["wr"].astype(jnp.float32),      # receiver matmul stays f32
        "br": params["br"].astype(jnp.float32),
        "w1": params["w1"].astype(jnp.bfloat16),     # net matmuls: bf16 operands
        "b1": params["b1"].astype(jnp.float32),
        "w2p": w2p,
        "b2p": b2p,
    }
    return prep, d_out


@functools.partial(jax.jit, static_argnames=("d_out", "tb", "out_dtype"))
def net_receiver_package_forward(x, prep, *, d_out, tb=512, out_dtype=jnp.bfloat16):
    """x: [B, D_in] float32.  prep: output of prepare_params (pre-cast/padded)."""
    wr, br, w1, b1, w2p, b2p = (
        prep["wr"], prep["br"], prep["w1"], prep["b1"], prep["w2p"], prep["b2p"],
    )
    B, D_in = x.shape
    H = wr.shape[1]
    H2, D_pad = w2p.shape

    tb_eff = _pick_tb(B, tb)
    grid = (pl.cdiv(B, tb_eff),)            # no materialized batch-pad copy:
                                            # Pallas clips the tail block's DMAs.

    res = lambda shape: pl.BlockSpec(shape, lambda i: (0, 0))   # VMEM-resident

    out_bytes = jnp.dtype(out_dtype).itemsize
    cost = pl.CostEstimate(
        flops=2 * B * (D_in * H + H * H2 + H2 * D_pad),
        transcendentals=B * H,
        bytes_accessed=(x.size * 4 + wr.size * 4 + w1.size * 2 + w2p.size * 2
                        + (br.size + b1.size + b2p.size) * 4
                        + B * D_pad * out_bytes),
    )

    out = pl.pallas_call(
        _fused_kernel,
        out_shape=jax.ShapeDtypeStruct((B, D_pad), out_dtype),
        grid=grid,
        in_specs=[
            pl.BlockSpec((tb_eff, D_in), lambda i: (i, 0)),   # x tile (pipelined)
            res((D_in, H)),                                   # Wr (f32)
            res((1, H)),                                      # br
            res((H, H2)),                                     # W1 (bf16)
            res((1, H2)),                                     # b1
            res((H2, D_pad)),                                 # W2 (bf16, padded)
            res((1, D_pad)),                                  # b2 (padded)
        ],
        out_specs=pl.BlockSpec((tb_eff, D_pad), lambda i: (i, 0)),
        compiler_params=pltpu.CompilerParams(
            dimension_semantics=("parallel",),
        ),
        cost_estimate=cost,
    )(x, wr, br, w1, b1, w2p, b2p)

    # A real consumer could fuse this slice instead of materializing it.
    return out[:, :d_out]


def make_params(key, d_in, hidden, hidden2, d_out):
    k = jax.random.split(key, 6)
    s = lambda fan_in: 1.0 / jnp.sqrt(jnp.float32(fan_in))
    return {
        "wr": jax.random.normal(k[0], (d_in, hidden), jnp.float32) * s(d_in),
        "br": jax.random.normal(k[1], (1, hidden), jnp.float32) * 0.01,
        "w1": jax.random.normal(k[2], (hidden, hidden2), jnp.float32) * s(hidden),
        "b1": jax.random.normal(k[3], (1, hidden2), jnp.float32) * 0.01,
        "w2": jax.random.normal(k[4], (hidden2, d_out), jnp.float32) * s(hidden2),
        "b2": jax.random.normal(k[5], (1, d_out), jnp.float32) * 0.01,
    }


def _reference(x, p):
    # pure-JAX f32 reference of the same composition (receiver -> net)
    h = jnp.tanh(x @ p["wr"] + p["br"])
    y1 = jnp.maximum(h @ p["w1"] + p["b1"], 0.0)
    return y1 @ p["w2"] + p["b2"]


if __name__ == "__main__":
    # 128-wide hidden dims (v5e MXU-exact; lane-dense everywhere); batch of 256
    # gives a grid of 2 tiles -> both TensorCores busy on v7x.
    B, D_IN, HID, HID2, D_OUT = 256, 32, 128, 128, 16

    key = jax.random.PRNGKey(0)
    k_x, k_p = jax.random.split(key)
    x = jax.random.normal(k_x, (B, D_IN), jnp.float32)
    params = make_params(k_p, D_IN, HID, HID2, D_OUT)

    # One-time weight preparation (cast + lane-pad), outside the per-call path.
    prep, d_out = prepare_params(params)

    out = net_receiver_package_forward(x, prep, d_out=d_out)
    out = jax.block_until_ready(out)

    ref = _reference(x, params)
    assert out.shape == (B, D_OUT)
    # bf16 net-matmul operands + bf16 output (f32 accumulation) -> loosened tol.
    assert jnp.allclose(out.astype(jnp.float32), ref, atol=3e-2, rtol=3e-2), \
        "mismatch vs reference"

    print("KERNEL_OK")
</pallas_src>

<mosaic_0001>
module attributes {stable_mosaic.version = 11 : i64} {
  func.func @_fused_kernel(%arg0: i32, %arg1: memref<128x32xf32, #tpu.memory_space<vmem>>, %arg2: memref<32x128xf32, #tpu.memory_space<vmem>>, %arg3: memref<1x128xf32, #tpu.memory_space<vmem>>, %arg4: memref<128x128xbf16, #tpu.memory_space<vmem>>, %arg5: memref<1x128xf32, #tpu.memory_space<vmem>>, %arg6: memref<128x128xbf16, #tpu.memory_space<vmem>>, %arg7: memref<1x128xf32, #tpu.memory_space<vmem>>, %arg8: memref<128x128xbf16, #tpu.memory_space<vmem>>) attributes {dimension_semantics = [#tpu.dimension_semantics<parallel>], iteration_bounds = array<i64: 2>, scalar_prefetch = 0 : i64, scratch_operands = 0 : i64, tpu.core_type = #tpu.core_type<tc>, window_params = [{transform_indices = @transform_0, window_bounds = array<i64: 128, 32>}, {pipeline_mode = #tpu.pipeline_mode<synchronous>, transform_indices = @transform_1, window_bounds = array<i64: 32, 128>}, {pipeline_mode = #tpu.pipeline_mode<synchronous>, transform_indices = @transform_2, window_bounds = array<i64: 1, 128>}, {pipeline_mode = #tpu.pipeline_mode<synchronous>, transform_indices = @transform_3, window_bounds = array<i64: 128, 128>}, {pipeline_mode = #tpu.pipeline_mode<synchronous>, transform_indices = @transform_4, window_bounds = array<i64: 1, 128>}, {pipeline_mode = #tpu.pipeline_mode<synchronous>, transform_indices = @transform_5, window_bounds = array<i64: 128, 128>}, {pipeline_mode = #tpu.pipeline_mode<synchronous>, transform_indices = @transform_6, window_bounds = array<i64: 1, 128>}, {transform_indices = @transform_7, window_bounds = array<i64: 128, 128>}]} {
    %c0 = arith.constant 0 : index
    %c0_0 = arith.constant 0 : index
    %0 = vector.load %arg1[%c0, %c0_0] : memref<128x32xf32, #tpu.memory_space<vmem>>, vector<128x32xf32>
    %c0_1 = arith.constant 0 : index
    %c0_2 = arith.constant 0 : index
    %1 = vector.load %arg2[%c0_1, %c0_2] : memref<32x128xf32, #tpu.memory_space<vmem>>, vector<32x128xf32>
    %cst = arith.constant dense<0.000000e+00> : vector<128x128xf32>
    %2 = tpu.matmul %0, %1, %cst {dimension_numbers = #tpu.dot_dimension_numbers<[1], [0], [0], [1], [0, 0, 1, 1], [], []>} : vector<128x32xf32>, vector<32x128xf32>, vector<128x128xf32> -> vector<128x128xf32>
    %c0_3 = arith.constant 0 : index
    %c0_4 = arith.constant 0 : index
    %3 = vector.load %arg3[%c0_3, %c0_4] : memref<1x128xf32, #tpu.memory_space<vmem>>, vector<1x128xf32>
    %4 = vector.broadcast %3 : vector<1x128xf32> to vector<128x128xf32>
    %5 = arith.addf %2, %4 : vector<128x128xf32>
    %6 = math.tanh %5 : vector<128x128xf32>
    %7 = arith.truncf %6 : vector<128x128xf32> to vector<128x128xbf16>
    %c0_5 = arith.constant 0 : index
    %c0_6 = arith.constant 0 : index
    %8 = vector.load %arg4[%c0_5, %c0_6] : memref<128x128xbf16, #tpu.memory_space<vmem>>, vector<128x128xbf16>
    %cst_7 = arith.constant dense<0.000000e+00> : vector<128x128xf32>
    %9 = tpu.matmul %7, %8, %cst_7 {dimension_numbers = #tpu.dot_dimension_numbers<[1], [0], [0], [1], [0, 0, 1, 1], [], []>} : vector<128x128xbf16>, vector<128x128xbf16>, vector<128x128xf32> -> vector<128x128xf32>
    %c0_8 = arith.constant 0 : index
    %c0_9 = arith.constant 0 : index
    %10 = vector.load %arg5[%c0_8, %c0_9] : memref<1x128xf32, #tpu.memory_space<vmem>>, vector<1x128xf32>
    %11 = vector.broadcast %10 : vector<1x128xf32> to vector<128x128xf32>
    %12 = arith.addf %9, %11 : vector<128x128xf32>
    %cst_10 = arith.constant 0.000000e+00 : f32
    %13 = vector.broadcast %cst_10 : f32 to vector<128x128xf32>
    %14 = arith.maximumf %12, %13 : vector<128x128xf32>
    %15 = arith.truncf %14 : vector<128x128xf32> to vector<128x128xbf16>
    %c0_11 = arith.constant 0 : index
    %c0_12 = arith.constant 0 : index
    %16 = vector.load %arg6[%c0_11, %c0_12] : memref<128x128xbf16, #tpu.memory_space<vmem>>, vector<128x128xbf16>
    %cst_13 = arith.constant dense<0.000000e+00> : vector<128x128xf32>
    %17 = tpu.matmul %15, %16, %cst_13 {dimension_numbers = #tpu.dot_dimension_numbers<[1], [0], [0], [1], [0, 0, 1, 1], [], []>} : vector<128x128xbf16>, vector<128x128xbf16>, vector<128x128xf32> -> vector<128x128xf32>
    %c0_14 = arith.constant 0 : index
    %c0_15 = arith.constant 0 : index
    %18 = vector.load %arg7[%c0_14, %c0_15] : memref<1x128xf32, #tpu.memory_space<vmem>>, vector<1x128xf32>
    %19 = vector.broadcast %18 : vector<1x128xf32> to vector<128x128xf32>
    %20 = arith.addf %17, %19 : vector<128x128xf32>
    %21 = arith.truncf %20 : vector<128x128xf32> to vector<128x128xbf16>
    %c0_16 = arith.constant 0 : index
    %c0_17 = arith.constant 0 : index
    %22 = vector.load %arg8[%c0_16, %c0_17] : memref<128x128xbf16, #tpu.memory_space<vmem>>, vector<128x128xbf16>
    tpu.vector_store %arg8[%c0_16, %c0_17], %21 {strides = array<i32>} : memref<128x128xbf16, #tpu.memory_space<vmem>>, vector<128x128xbf16>,
    return
  }
  func.func @transform_0(%arg0: i32) -> (i32, i32) {
    %c0_i32 = arith.constant 0 : i32
    %c0_i32_0 = arith.constant 0 : i32
    return %arg0, %c0_i32 : i32, i32
  }
  func.func @transform_1(%arg0: i32) -> (i32, i32) {
    %c0_i32 = arith.constant 0 : i32
    %c0_i32_0 = arith.constant 0 : i32
    %c0_i32_1 = arith.constant 0 : i32
    return %c0_i32, %c0_i32_0 : i32, i32
  }
  func.func @transform_2(%arg0: i32) -> (i32, i32) {
    %c0_i32 = arith.constant 0 : i32
    %c0_i32_0 = arith.constant 0 : i32
    %c0_i32_1 = arith.constant 0 : i32
    return %c0_i32, %c0_i32_0 : i32, i32
  }
  func.func @transform_3(%arg0: i32) -> (i32, i32) {
    %c0_i32 = arith.constant 0 : i32
    %c0_i32_0 = arith.constant 0 : i32
    %c0_i32_1 = arith.constant 0 : i32
    return %c0_i32, %c0_i32_0 : i32, i32
  }
  func.func @transform_4(%arg0: i32) -> (i32, i32) {
    %c0_i32 = arith.constant 0 : i32
    %c0_i32_0 = arith.constant 0 : i32
    %c0_i32_1 = arith.constant 0 : i32
    return %c0_i32, %c0_i32_0 : i32, i32
  }
  func.func @transform_5(%arg0: i32) -> (i32, i32) {
    %c0_i32 = arith.constant 0 : i32
    %c0_i32_0 = arith.constant 0 : i32
    %c0_i32_1 = arith.constant 0 : i32
    return %c0_i32, %c0_i32_0 : i32, i32
  }
  func.func @transform_6(%arg0: i32) -> (i32, i32) {
    %c0_i32 = arith.constant 0 : i32
    %c0_i32_0 = arith.constant 0 : i32
    %c0_i32_1 = arith.constant 0 : i32
    return %c0_i32, %c0_i32_0 : i32, i32
  }
  func.func @transform_7(%arg0: i32) -> (i32, i32) {
    %c0_i32 = arith.constant 0 : i32
    %c0_i32_0 = arith.constant 0 : i32
    return %arg0, %c0_i32 : i32, i32
  }
}

</mosaic_0001>

<llo_original>
// kernel: net_receiver_package_forward.1
$region0: #{net_receiver_package_forward.1}
  #allocation0 [shape = 'u32[]', space=smem, size = 0x4, offset = 0x4, fixed_abs, tag = 'smem constant byte address 0x4 - core index']
  #allocation1 [shape = 'u32[144,128]{1,0:T(1,128)}', space=vmem, size = 0x12000, scoped, tag = 'internal scratch']
  %s0 = inlined_call_operand.vmem [shape: f32[256,32], index: 0, kind: input, shape index: {}]
  %s1 = inlined_call_operand.vmem [shape: f32[32,128], index: 1, kind: input, shape index: {}]
  %s2 = inlined_call_operand.vmem [shape: f32[1,128], index: 2, kind: input, shape index: {}]
  %s3 = inlined_call_operand.vmem [shape: bf16[128,128], index: 3, kind: input, shape index: {}]
  %s4 = inlined_call_operand.vmem [shape: f32[1,128], index: 4, kind: input, shape index: {}]
  %s5 = inlined_call_operand.vmem [shape: bf16[128,128], index: 5, kind: input, shape index: {}]
  %s6 = inlined_call_operand.vmem [shape: f32[1,128], index: 6, kind: input, shape index: {}]
  %s7 = inlined_call_operand.vmem [shape: bf16[256,128], index: 7, kind: output, shape index: {}]
  %s8 = sld [smem:[#allocation0]]
  $region61: #{net_receiver_package_forward.1} parent=0
    _
  %s10 = ssub.s32 1, %s8
  %s11 = scalar_select 0, %s10, %s8
  loop: start=0, step=1, limit=4
  $region2: #{net_receiver_package_forward.1} parent=0 // loop_pre_header
    _
  $region3: #{net_receiver_package_forward.1} parent=0 // loop_header
    %s13 = sphi 0, %s17
    %p14 = scmp.ge.s32.totalorder %s13, 4
    %s23 = sphi 0, %s25
    %s26 = sphi 0, %s23
    %s27 = sphi 0, %s26
    %s43 = sphi 0, %s27
    %s47 = sphi 0, %s47
    %s49 = sphi 0, %s47
    %s50 = sphi 0, %s49
    %s64 = sphi 0, %s50
    %s68 = sphi 0, %s68
    %s70 = sphi 0, %s68
    %s71 = sphi 0, %s70
    %s85 = sphi 0, %s71
    %s89 = sphi 0, %s89
    %s91 = sphi 0, %s89
    %s92 = sphi 0, %s91
    %s106 = sphi 0, %s92
    %s110 = sphi 0, %s110
    %s112 = sphi 0, %s110
    %s113 = sphi 0, %s112
    %s127 = sphi 0, %s113
    %s131 = sphi 0, %s131
    %s133 = sphi 0, %s131
    %s134 = sphi 0, %s133
    %s148 = sphi 0, %s134
    %s152 = sphi 0, %s152
    %s154 = sphi 0, %s152
    %s155 = sphi 0, %s154
    %s169 = sphi 0, %s155
    %s175 = sphi 0, %s177
    %s178 = sphi 0, %s175
    %s179 = sphi 0, %s178
    %s195 = sphi 0, %s179
  $region4: #{net_receiver_package_forward.1} parent=0 // loop_header_branch
    %16 = sbr.rel (%p14) target = $region8
  $region5: #{net_receiver_package_forward.1} parent=0 // loop_body
    %s18 = ssub.s32 %s13, 1
    %s19 = ssub.s32 %s13, 2
    %s20 = sadd.s32 %s13, 1
    %s21 = ssub.s32 %s13, %s20
    %p22 = scmp.eq.s32.totalorder %s21, 0
    %s24 = sadd.s32 %s23, 1
    %s25 = scalar_select %p22, %s23, %s24
    %p28 = pneg %p22
    %p29 = scmp.eq.s32.totalorder %s13, 1
    %p30 = por %p28, %p29
    %p31 = scmp.ne.s32.totalorder %s23, %s26
    %p32 = scmp.eq.s32.totalorder %s13, 0
    %p33 = por %p31, %p32
    %p34 = scmp.ne.s32.totalorder %s23, %s26
    %p35 = scmp.eq.s32.totalorder %s18, 1
    %p36 = por %p34, %p35
    %p37 = scmp.ne.s32.totalorder %s26, %s27
    %p38 = scmp.eq.s32.totalorder %s18, 0
    %p39 = por %p37, %p38
    %p40 = scmp.ne.s32.totalorder %s26, %s27
    %p41 = scmp.eq.s32.totalorder %s19, 1
    %p42 = por %p40, %p41
    %p44 = scmp.ne.s32.totalorder %s27, %s43
    %p45 = scmp.eq.s32.totalorder %s19, 0
    %p46 = por %p44, %p45
    %s48 = sadd.s32 %s47, 1
    %p51 = scmp.eq.s32.totalorder %s13, 1
    %p52 = scmp.ne.s32.totalorder %s47, %s49
    %p53 = scmp.eq.s32.totalorder %s13, 0
    %p54 = por %p52, %p53
    %p55 = scmp.ne.s32.totalorder %s47, %s49
    %p56 = scmp.eq.s32.totalorder %s18, 1
    %p57 = por %p55, %p56
    %p58 = scmp.ne.s32.totalorder %s49, %s50
    %p59 = scmp.eq.s32.totalorder %s18, 0
    %p60 = por %p58, %p59
    %p61 = scmp.ne.s32.totalorder %s49, %s50
    %p62 = scmp.eq.s32.totalorder %s19, 1
    %p63 = por %p61, %p62
    %p65 = scmp.ne.s32.totalorder %s50, %s64
    %p66 = scmp.eq.s32.totalorder %s19, 0
    %p67 = por %p65, %p66
    %s69 = sadd.s32 %s68, 1
    %p72 = scmp.eq.s32.totalorder %s13, 1
    %p73 = scmp.ne.s32.totalorder %s68, %s70
    %p74 = scmp.eq.s32.totalorder %s13, 0
    %p75 = por %p73, %p74
    %p76 = scmp.ne.s32.totalorder %s68, %s70
    %p77 = scmp.eq.s32.totalorder %s18, 1
    %p78 = por %p76, %p77
    %p79 = scmp.ne.s32.totalorder %s70, %s71
    %p80 = scmp.eq.s32.totalorder %s18, 0
    %p81 = por %p79, %p80
    %p82 = scmp.ne.s32.totalorder %s70, %s71
    %p83 = scmp.eq.s32.totalorder %s19, 1
    %p84 = por %p82, %p83
    %p86 = scmp.ne.s32.totalorder %s71, %s85
    %p87 = scmp.eq.s32.totalorder %s19, 0
    %p88 = por %p86, %p87
    %s90 = sadd.s32 %s89, 1
    %p93 = scmp.eq.s32.totalorder %s13, 1
    %p94 = scmp.ne.s32.totalorder %s89, %s91
    %p95 = scmp.eq.s32.totalorder %s13, 0
    %p96 = por %p94, %p95
    %p97 = scmp.ne.s32.totalorder %s89, %s91
    %p98 = scmp.eq.s32.totalorder %s18, 1
    %p99 = por %p97, %p98
    %p100 = scmp.ne.s32.totalorder %s91, %s92
    %p101 = scmp.eq.s32.totalorder %s18, 0
    %p102 = por %p100, %p101
    %p103 = scmp.ne.s32.totalorder %s91, %s92
    %p104 = scmp.eq.s32.totalorder %s19, 1
    %p105 = por %p103, %p104
    %p107 = scmp.ne.s32.totalorder %s92, %s106
    %p108 = scmp.eq.s32.totalorder %s19, 0
    %p109 = por %p107, %p108
    %s111 = sadd.s32 %s110, 1
    %p114 = scmp.eq.s32.totalorder %s13, 1
    %p115 = scmp.ne.s32.totalorder %s110, %s112
    %p116 = scmp.eq.s32.totalorder %s13, 0
    %p117 = por %p115, %p116
    %p118 = scmp.ne.s32.totalorder %s110, %s112
    %p119 = scmp.eq.s32.totalorder %s18, 1
    %p120 = por %p118, %p119
    %p121 = scmp.ne.s32.totalorder %s112, %s113
    %p122 = scmp.eq.s32.totalorder %s18, 0
    %p123 = por %p121, %p122
    %p124 = scmp.ne.s32.totalorder %s112, %s113
    %p125 = scmp.eq.s32.totalorder %s19, 1
    %p126 = por %p124, %p125
    %p128 = scmp.ne.s32.totalorder %s113, %s127
    %p129 = scmp.eq.s32.totalorder %s19, 0
    %p130 = por %p128, %p129
    %s132 = sadd.s32 %s131, 1
    %p135 = scmp.eq.s32.totalorder %s13, 1
    %p136 = scmp.ne.s32.totalorder %s131, %s133
    %p137 = scmp.eq.s32.totalorder %s13, 0
    %p138 = por %p136, %p137
    %p139 = scmp.ne.s32.totalorder %s131, %s133
    %p140 = scmp.eq.s32.totalorder %s18, 1
    %p141 = por %p139, %p140
    %p142 = scmp.ne.s32.totalorder %s133, %s134
    %p143 = scmp.eq.s32.totalorder %s18, 0
    %p144 = por %p142, %p143
    %p145 = scmp.ne.s32.totalorder %s133, %s134
    %p146 = scmp.eq.s32.totalorder %s19, 1
    %p147 = por %p145, %p146
    %p149 = scmp.ne.s32.totalorder %s134, %s148
    %p150 = scmp.eq.s32.totalorder %s19, 0
    %p151 = por %p149, %p150
    %s153 = sadd.s32 %s152, 1
    %p156 = scmp.eq.s32.totalorder %s13, 1
    %p157 = scmp.ne.s32.totalorder %s152, %s154
    %p158 = scmp.eq.s32.totalorder %s13, 0
    %p159 = por %p157, %p158
    %p160 = scmp.ne.s32.totalorder %s152, %s154
    %p161 = scmp.eq.s32.totalorder %s18, 1
    %p162 = por %p160, %p161
    %p163 = scmp.ne.s32.totalorder %s154, %s155
    %p164 = scmp.eq.s32.totalorder %s18, 0
    %p165 = por %p163, %p164
    %p166 = scmp.ne.s32.totalorder %s154, %s155
    %p167 = scmp.eq.s32.totalorder %s19, 1
    %p168 = por %p166, %p167
    %p170 = scmp.ne.s32.totalorder %s155, %s169
    %p171 = scmp.eq.s32.totalorder %s19, 0
    %p172 = por %p170, %p171
    %s173 = ssub.s32 %s13, %s20
    %p174 = scmp.eq.s32.totalorder %s173, 0
    %s176 = sadd.s32 %s175, 1
    %s177 = scalar_select %p174, %s175, %s176
    %p180 = pneg %p174
    %p181 = scmp.eq.s32.totalorder %s13, 1
    %p182 = por %p180, %p181
    %p183 = scmp.ne.s32.totalorder %s175, %s178
    %p184 = scmp.eq.s32.totalorder %s13, 0
    %p185 = por %p183, %p184
    %p186 = scmp.ne.s32.totalorder %s175, %s178
    %p187 = scmp.eq.s32.totalorder %s18, 1
    %p188 = por %p186, %p187
    %p189 = scmp.ne.s32.totalorder %s178, %s179
    %p190 = scmp.eq.s32.totalorder %s18, 0
    %p191 = por %p189, %p190
    %p192 = scmp.ne.s32.totalorder %s178, %s179
    %p193 = scmp.eq.s32.totalorder %s19, 1
    %p194 = por %p192, %p193
    %p196 = scmp.ne.s32.totalorder %s179, %s195
    %p197 = scmp.eq.s32.totalorder %s19, 0
    %p198 = por %p196, %p197
    %p199 = scmp.le.s32.totalorder 1, %s13
    %p200 = scmp.lt.s32.totalorder %s13, 3
    %p201 = pnand %p199, %p200
    %p202 = pneg %p201
    // Predicated region
    $region9: #{net_receiver_package_forward.1} parent=5 // pred_check
      _
    $region10: #{net_receiver_package_forward.1} parent=5 // pred_check_branch
      %204 = sbr.rel (%p201) target = $region12
    $region11: #{net_receiver_package_forward.1} parent=5 // pred_region
      %s205 = ssub.s32 %s13, 1
      // Predicated region
      $region13: #{net_receiver_package_forward.1} parent=11 // pred_check
        %p206 = pneg %p60
      $region14: #{net_receiver_package_forward.1} parent=11 // pred_check_branch
        %208 = sbr.rel (%p206) target = $region16
      $region15: #{net_receiver_package_forward.1} parent=11 // pred_region
        _
      $region16: #{net_receiver_package_forward.1} parent=11 // pred_fallthru
        _
      // Predicated region
      $region17: #{net_receiver_package_forward.1} parent=11 // pred_check
        %p209 = pneg %p81
      $region18: #{net_receiver_package_forward.1} parent=11 // pred_check_branch
        %211 = sbr.rel (%p209) target = $region20
      $region19: #{net_receiver_package_forward.1} parent=11 // pred_region
        _
      $region20: #{net_receiver_package_forward.1} parent=11 // pred_fallthru
        _
      // Predicated region
      $region21: #{net_receiver_package_forward.1} parent=11 // pred_check
        %p212 = pneg %p102
      $region22: #{net_receiver_package_forward.1} parent=11 // pred_check_branch
        %214 = sbr.rel (%p212) target = $region24
      $region23: #{net_receiver_package_forward.1} parent=11 // pred_region
        _
      $region24: #{net_receiver_package_forward.1} parent=11 // pred_fallthru
        _
      // Predicated region
      $region25: #{net_receiver_package_forward.1} parent=11 // pred_check
        %p215 = pneg %p123
      $region26: #{net_receiver_package_forward.1} parent=11 // pred_check_branch
        %217 = sbr.rel (%p215) target = $region28
      $region27: #{net_receiver_package_forward.1} parent=11 // pred_region
        _
      $region28: #{net_receiver_package_forward.1} parent=11 // pred_fallthru
        _
      // Predicated region
      $region29: #{net_receiver_package_forward.1} parent=11 // pred_check
        %p218 = pneg %p144
      $region30: #{net_receiver_package_forward.1} parent=11 // pred_check_branch
        %220 = sbr.rel (%p218) target = $region32
      $region31: #{net_receiver_package_forward.1} parent=11 // pred_region
        _
      $region32: #{net_receiver_package_forward.1} parent=11 // pred_fallthru
        _
      // Predicated region
      $region33: #{net_receiver_package_forward.1} parent=11 // pred_check
        %p221 = pneg %p165
      $region34: #{net_receiver_package_forward.1} parent=11 // pred_check_branch
        %223 = sbr.rel (%p221) target = $region36
      $region35: #{net_receiver_package_forward.1} parent=11 // pred_region
        _
      $region36: #{net_receiver_package_forward.1} parent=11 // pred_fallthru
        _
    $region12: #{net_receiver_package_forward.1} parent=5 // pred_fallthru
      _
    %p224 = scmp.lt.s32.totalorder %s13, 2
    // Predicated region
    $region37: #{net_receiver_package_forward.1} parent=5 // pred_check
      %p225 = pneg %p224
    $region38: #{net_receiver_package_forward.1} parent=5 // pred_check_branch
      %227 = sbr.rel (%p225) target = $region40
    $region39: #{net_receiver_package_forward.1} parent=5 // pred_region
      // Predicated region
      $region41: #{net_receiver_package_forward.1} parent=39 // pred_check
        %p228 = pneg %p33
      $region42: #{net_receiver_package_forward.1} parent=39 // pred_check_branch
        %230 = sbr.rel (%p228) target = $region44
      $region43: #{net_receiver_package_forward.1} parent=39 // pred_region
        %s231 = smul.u32 16, %s13
        %p232 = scmp.lt.s32.totalorder %s231, 31
        %s233 = scalar_select %p232, %s231, 31
        %s234 = smul.addr %s233, 8
        %s235 = scalar_lea.vmem %s0, %s234
        %s236 = smul.u32 16, %s13
      $region44: #{net_receiver_package_forward.1} parent=39 // pred_fallthru
        _
    $region40: #{net_receiver_package_forward.1} parent=5 // pred_fallthru
      _
    %p237 = scmp.le.s32.totalorder 1, %s13
    %p238 = scmp.lt.s32.totalorder %s13, 3
    %p239 = pnand %p237, %p238
    %p240 = pneg %p239
    // Predicated region
    $region45: #{net_receiver_package_forward.1} parent=5 // pred_check
      _
    $region46: #{net_receiver_package_forward.1} parent=5 // pred_check_branch
      %242 = sbr.rel (%p239) target = $region48
    $region47: #{net_receiver_package_forward.1} parent=5 // pred_region
      %s243 = ssub.s32 %s13, 1
      %s244 = smul.u32 16, %s18
      %p245 = scmp.lt.s32.totalorder %s244, 31
      %s246 = scalar_select %p245, %s244, 31
      %s247 = smul.addr %s246, 8
      %s248 = scalar_lea.vmem %s0, %s247
      %p249 = pneg %p39
      %p250 = pneg %p36
      %p251 = pneg %p60
      %p252 = pneg %p57
      %p253 = pneg %p81
      %p254 = pneg %p78
      %p255 = pneg %p102
      %p256 = pneg %p99
      %p257 = pneg %p123
      %p258 = pneg %p120
      %p259 = pneg %p144
      %p260 = pneg %p141
      %p261 = pneg %p165
      %p262 = pneg %p162
      %p263 = pneg %p191
      %p264 = pneg %p188
      %s265 = smul.u32 16, %s18
      %p266 = scmp.lt.s32.totalorder %s265, 31
      %s267 = scalar_select %p266, %s265, 31
      %s268 = smul.addr %s267, 4
      %s269 = scalar_lea.vmem %s7, %s268
      %s270 = smul.u32 16, %s18
      %p271 = scmp.lt.s32.totalorder %s270, 31
      %s272 = scalar_select %p271, %s270, 31
      %s273 = smul.addr %s272, 8
      %s274 = scalar_lea.vmem %s0, %s273
      %s275 = smul.u32 16, %s18
      %s276 = smul.u32 16, %s18
      %p277 = scmp.lt.s32.totalorder %s276, 31
      %s278 = scalar_select %p277, %s276, 31
      %s279 = smul.addr %s278, 4
      %s280 = scalar_lea.vmem %s7, %s279
      %s281 = smul.u32 16, %s18
      %v283 = vld [vmem:[%s274] sm:$0xff]
      %v284 = vld [vmem:[%s274 + $0x8] sm:$0xff]
      %v285 = vld [vmem:[%s274 + $0x10] sm:$0xff]
      %v286 = vld [vmem:[%s274 + $0x18] sm:$0xff]
      %v287 = vld [vmem:[%s274 + $0x20] sm:$0xff]
      %v288 = vld [vmem:[%s274 + $0x28] sm:$0xff]
      %v289 = vld [vmem:[%s274 + $0x30] sm:$0xff]
      %v290 = vld [vmem:[%s274 + $0x38] sm:$0xff]
      %v291 = vld [vmem:[%s274 + $0x40] sm:$0xff]
      %v292 = vld [vmem:[%s274 + $0x48] sm:$0xff]
      %v293 = vld [vmem:[%s274 + $0x50] sm:$0xff]
      %v294 = vld [vmem:[%s274 + $0x58] sm:$0xff]
      %v295 = vld [vmem:[%s274 + $0x60] sm:$0xff]
      %v296 = vld [vmem:[%s274 + $0x68] sm:$0xff]
      %v297 = vld [vmem:[%s274 + $0x70] sm:$0xff]
      %v298 = vld [vmem:[%s274 + $0x78] sm:$0xff]
      %v299 = vld [vmem:[%s1] sm:$0xff]
      %v300 = vld [vmem:[%s1 + $0x8] sm:$0xff]
      %v301 = vld [vmem:[%s1 + $0x10] sm:$0xff]
      %v302 = vld [vmem:[%s1 + $0x18] sm:$0xff]
      %v303 = vld [vmem:[%s2] sm:$0x1]
      %v305 = vlaneseq
      %v306 = vshrl.u32 %v305, 7
      %v307 = vsub.s32 0, %v306
      %v308 = vrot.slane %v303, %v307
      %vm310 = vcmask 261120
      %v312 = vsel %vm310, %v283, 0
      %v315 = vsel %vm310, %v284, 0
      %v318 = vsel %vm310, %v285, 0
      %v321 = vsel %vm310, %v286, 0
      %v324 = vsel %vm310, %v287, 0
      %v327 = vsel %vm310, %v288, 0
      %v330 = vsel %vm310, %v289, 0
      %v333 = vsel %vm310, %v290, 0
      %v336 = vsel %vm310, %v291, 0
      %v339 = vsel %vm310, %v292, 0
      %v342 = vsel %vm310, %v293, 0
      %v345 = vsel %vm310, %v294, 0
      %v348 = vsel %vm310, %v295, 0
      %v351 = vsel %vm310, %v296, 0
      %v354 = vsel %vm310, %v297, 0
      %v357 = vsel %vm310, %v298, 0
      %359 = vmatprep.subr.mxu0 0.0
      %360 = vmatpush1.msra.mxu0 0.0
      %361 = vmatprep.subr.mxu0 0.0
      %362 = vmatpush1.msra.mxu0 0.0
      %363 = vmatprep.subr.mxu0 0.0
      %364 = vmatpush1.msra.mxu0 0.0
      %365 = vmatprep.subr.mxu0 0.0
      %366 = vmatpush1.msra.mxu0 0.0
      %367 = vmatprep.subr.mxu0 0.0
      %368 = vmatpush1.msra.mxu0 0.0
      %369 = vmatprep.subr.mxu0 0.0
      %370 = vmatpush1.msra.mxu0 0.0
      %371 = vmatprep.subr.mxu0 0.0
      %372 = vmatpush1.msra.mxu0 0.0
      %373 = vmatprep.subr.mxu0 0.0
      %374 = vmatpush1.msra.mxu0 0.0
      %375 = vmatprep.subr.mxu0 0.0
      %376 = vmatpush1.msra.mxu0 0.0
      %377 = vmatprep.subr.mxu0 0.0
      %378 = vmatpush1.msra.mxu0 0.0
      %379 = vmatprep.subr.mxu0 0.0
      %380 = vmatpush1.msra.mxu0 0.0
      %381 = vmatprep.subr.mxu0 0.0
      %382 = vmatpush1.msra.mxu0 0.0
      %383 = vmatprep.subr.mxu0 0.0
      %384 = vmatpush1.msra.mxu0 %v302
      %385 = vmatprep.subr.mxu0 0.0
      %386 = vmatpush1.msra.mxu0 %v301
      %387 = vmatprep.subr.mxu0 0.0
      %388 = vmatpush1.msra.mxu0 %v300
      %389 = vmatprep.subr.mxu0 0.0
      %390 = vmatpush1.msra.mxu0 %v299
      %391 = vmatprep.subr.mxu0 0.0
      %392 = vmatpush2.msra.mxu0 0.0
      %393 = vmatprep.subr.mxu0 0.0
      %394 = vmatpush2.msra.mxu0 0.0
      %395 = vmatprep.subr.mxu0 0.0
      %396 = vmatpush2.msra.mxu0 0.0
      %397 = vmatprep.subr.mxu0 0.0
      %398 = vmatpush2.msra.mxu0 0.0
      %399 = vmatprep.subr.mxu0 0.0
      %400 = vmatpush2.msra.mxu0 0.0
      %401 = vmatprep.subr.mxu0 0.0
      %402 = vmatpush2.msra.mxu0 0.0
      %403 = vmatprep.subr.mxu0 0.0
      %404 = vmatpush2.msra.mxu0 0.0
      %405 = vmatprep.subr.mxu0 0.0
      %406 = vmatpush2.msra.mxu0 0.0
      %407 = vmatprep.subr.mxu0 0.0
      %408 = vmatpush2.msra.mxu0 0.0
      %409 = vmatprep.subr.mxu0 0.0
      %410 = vmatpush2.msra.mxu0 0.0
      %411 = vmatprep.subr.mxu0 0.0
      %412 = vmatpush2.msra.mxu0 0.0
      %413 = vmatprep.subr.mxu0 0.0
      %414 = vmatpush2.msra.mxu0 0.0
      %415 = vmatprep.subr.mxu0 0.0
      %416 = vmatpush2.msra.mxu0 0.0
      %417 = vmatprep.subr.mxu0 0.0
      %418 = vmatpush2.msra.mxu0 0.0
      %419 = vmatprep.subr.mxu0 0.0
      %420 = vmatpush2.msra.mxu0 0.0
      %421 = vmatprep.subr.mxu0 0.0
      %422 = vmatpush2.msra.mxu0 0.0
      %423 = vmatprep.mubr.f32.mxu0 0.0
      %424 = vmatmul.mubr.f32.gmra.mxu0 %v312
      %v425 = vpop.f32.mrf.mxu0
      %v426 = vadd.f32 %v308, %v425
      %v427 = vpop.f32.mrf.mxu0
      %428 = vmatprep.mubr.f32.mxu0 0.0
      %429 = vmatmul.mubr.f32.gmra.mxu0 %v315
      %v430 = vpop.f32.mrf.mxu0
      %v431 = vadd.f32 %v308, %v430
      %v432 = vpop.f32.mrf.mxu0
      %433 = vmatprep.mubr.f32.mxu0 0.0
      %434 = vmatmul.mubr.f32.gmra.mxu0 %v318
      %v435 = vpop.f32.mrf.mxu0
      %v436 = vadd.f32 %v308, %v435
      %v437 = vpop.f32.mrf.mxu0
      %438 = vmatprep.mubr.f32.mxu0 0.0
      %439 = vmatmul.mubr.f32.gmra.mxu0 %v321
      %v440 = vpop.f32.mrf.mxu0
      %v441 = vadd.f32 %v308, %v440
      %v442 = vpop.f32.mrf.mxu0
      %443 = vmatprep.mubr.f32.mxu0 0.0
      %444 = vmatmul.mubr.f32.gmra.mxu0 %v324
      %v445 = vpop.f32.mrf.mxu0
      %v446 = vadd.f32 %v308, %v445
      %v447 = vpop.f32.mrf.mxu0
      %448 = vmatprep.mubr.f32.mxu0 0.0
      %449 = vmatmul.mubr.f32.gmra.mxu0 %v327
      %v450 = vpop.f32.mrf.mxu0
      %v451 = vadd.f32 %v308, %v450
      %v452 = vpop.f32.mrf.mxu0
      %453 = vmatprep.mubr.f32.mxu0 0.0
      %454 = vmatmul.mubr.f32.gmra.mxu0 %v330
      %v455 = vpop.f32.mrf.mxu0
      %v456 = vadd.f32 %v308, %v455
      %v457 = vpop.f32.mrf.mxu0
      %458 = vmatprep.mubr.f32.mxu0 0.0
      %459 = vmatmul.mubr.f32.gmra.mxu0 %v333
      %v460 = vpop.f32.mrf.mxu0
      %v461 = vadd.f32 %v308, %v460
      %v462 = vpop.f32.mrf.mxu0
      %463 = vmatprep.mubr.f32.mxu0 0.0
      %464 = vmatmul.mubr.f32.gmra.mxu0 %v336
      %v465 = vpop.f32.mrf.mxu0
      %v466 = vadd.f32 %v308, %v465
      %v467 = vpop.f32.mrf.mxu0
      %468 = vmatprep.mubr.f32.mxu0 0.0
      %469 = vmatmul.mubr.f32.gmra.mxu0 %v339
      %v470 = vpop.f32.mrf.mxu0
      %v471 = vadd.f32 %v308, %v470
      %v472 = vpop.f32.mrf.mxu0
      %473 = vmatprep.mubr.f32.mxu0 0.0
      %474 = vmatmul.mubr.f32.gmra.mxu0 %v342
      %v475 = vpop.f32.mrf.mxu0
      %v476 = vadd.f32 %v308, %v475
      %v477 = vpop.f32.mrf.mxu0
      %478 = vmatprep.mubr.f32.mxu0 0.0
      %479 = vmatmul.mubr.f32.gmra.mxu0 %v345
      %v480 = vpop.f32.mrf.mxu0
      %v481 = vadd.f32 %v308, %v480
      %v482 = vpop.f32.mrf.mxu0
      %483 = vmatprep.mubr.f32.mxu0 0.0
      %484 = vmatmul.mubr.f32.gmra.mxu0 %v348
      %v485 = vpop.f32.mrf.mxu0
      %v486 = vadd.f32 %v308, %v485
      %v487 = vpop.f32.mrf.mxu0
      %488 = vmatprep.mubr.f32.mxu0 0.0
      %489 = vmatmul.mubr.f32.gmra.mxu0 %v351
      %v490 = vpop.f32.mrf.mxu0
      %v491 = vadd.f32 %v308, %v490
      %v492 = vpop.f32.mrf.mxu0
      %493 = vmatprep.mubr.f32.mxu0 0.0
      %494 = vmatmul.mubr.f32.gmra.mxu0 %v354
      %v495 = vpop.f32.mrf.mxu0
      %v496 = vadd.f32 %v308, %v495
      %v497 = vpop.f32.mrf.mxu0
      %498 = vmatprep.mubr.f32.mxu0 0.0
      %499 = vmatmul.mubr.f32.gmra.mxu0 %v357
      %v500 = vpop.f32.mrf.mxu0
      %v501 = vadd.f32 %v308, %v500
      %v502 = vpop.f32.mrf.mxu0
      %503 = vdwg.mxu0
      %v504 = vtanh.pop %v426
      %v505 = vtanh.pop %v431
      %v506 = vtanh.pop %v436
      %v507 = vtanh.pop %v441
      %v508 = vtanh.pop %v446
      %v509 = vtanh.pop %v451
      %v510 = vtanh.pop %v456
      %v511 = vtanh.pop %v461
      %v512 = vtanh.pop %v466
      %v513 = vtanh.pop %v471
      %v514 = vtanh.pop %v476
      %v515 = vtanh.pop %v481
      %v516 = vtanh.pop %v486
      %v517 = vtanh.pop %v491
      %v518 = vtanh.pop %v496
      %v519 = vtanh.pop %v501
      %v520 = vpack.c.bf16 %v505, %v504
      %v521 = vpack.c.bf16 %v507, %v506
      %v522 = vpack.c.bf16 %v509, %v508
      %v523 = vpack.c.bf16 %v511, %v510
      %v524 = vpack.c.bf16 %v513, %v512
      %v525 = vpack.c.bf16 %v515, %v514
      %v526 = vpack.c.bf16 %v517, %v516
      %v527 = vpack.c.bf16 %v519, %v518
      %v528 = vld [vmem:[%s3] sm:$0xf]
      %v529 = vld [vmem:[%s3 + $0x4] sm:$0xf]
      %v530 = vld [vmem:[%s3 + $0x8] sm:$0xf]
      %v531 = vld [vmem:[%s3 + $0xc] sm:$0xf]
      %v532 = vld [vmem:[%s3 + $0x10] sm:$0xf]
      %v533 = vld [vmem:[%s3 + $0x14] sm:$0xf]
      %v534 = vld [vmem:[%s3 + $0x18] sm:$0xf]
      %v535 = vld [vmem:[%s3 + $0x1c] sm:$0xf]
      %v536 = vld [vmem:[%s3 + $0x20] sm:$0xf]
      %v537 = vld [vmem:[%s3 + $0x24] sm:$0xf]
      %v538 = vld [vmem:[%s3 + $0x28] sm:$0xf]
      %v539 = vld [vmem:[%s3 + $0x2c] sm:$0xf]
      %v540 = vld [vmem:[%s3 + $0x30] sm:$0xf]
      %v541 = vld [vmem:[%s3 + $0x34] sm:$0xf]
      %v542 = vld [vmem:[%s3 + $0x38] sm:$0xf]
      %v543 = vld [vmem:[%s3 + $0x3c] sm:$0xf]
      %v544 = vld [vmem:[%s4] sm:$0x1]
      %v546 = vlaneseq
      %v547 = vshrl.u32 %v546, 7
      %v548 = vsub.s32 0, %v547
      %v549 = vrot.slane %v544, %v548
      %v567 = vunpack.c.l.b16 %v528
      %v568 = vunpack.c.l.b16 %v529
      %v569 = vunpack.c.l.b16 %v530
      %v570 = vunpack.c.l.b16 %v531
      %v571 = vunpack.c.l.b16 %v532
      %v572 = vunpack.c.l.b16 %v533
      %v573 = vunpack.c.l.b16 %v534
      %v574 = vunpack.c.l.b16 %v535
      %v575 = vunpack.c.l.b16 %v536
      %v576 = vunpack.c.l.b16 %v537
      %v577 = vunpack.c.l.b16 %v538
      %v578 = vunpack.c.l.b16 %v539
      %v579 = vunpack.c.l.b16 %v540
      %v580 = vunpack.c.l.b16 %v541
      %v581 = vunpack.c.l.b16 %v542
      %v582 = vunpack.c.l.b16 %v543
      %v583 = vpack.c.b16 %v568, %v567
      %v584 = vpack.c.b16 %v570, %v569
      %v585 = vpack.c.b16 %v572, %v571
      %v586 = vpack.c.b16 %v574, %v573
      %v587 = vpack.c.b16 %v576, %v575
      %v588 = vpack.c.b16 %v578, %v577
      %v589 = vpack.c.b16 %v580, %v579
      %v590 = vpack.c.b16 %v582, %v581
      %599 = vmatprep.subr.bf16.mxu0 0
      %600 = vmatpush1.bf16.msra.mxu0 %v590
      %601 = vmatprep.subr.bf16.mxu0 0
      %602 = vmatpush1.bf16.msra.mxu0 %v589
      %603 = vmatprep.subr.bf16.mxu0 0
      %604 = vmatpush1.bf16.msra.mxu0 %v588
      %605 = vmatprep.subr.bf16.mxu0 0
      %606 = vmatpush1.bf16.msra.mxu0 %v587
      %607 = vmatprep.subr.bf16.mxu0 0
      %608 = vmatpush1.bf16.msra.mxu0 %v586
      %609 = vmatprep.subr.bf16.mxu0 0
      %610 = vmatpush1.bf16.msra.mxu0 %v585
      %611 = vmatprep.subr.bf16.mxu0 0
      %612 = vmatpush1.bf16.msra.mxu0 %v584
      %613 = vmatprep.subr.bf16.mxu0 0
      %614 = vmatpush1.bf16.msra.mxu0 %v583
      %615 = vmatprep.subr.bf16.mxu0 0
      %616 = vmatpush2.bf16.msra.mxu0 0
      %617 = vmatprep.subr.bf16.mxu0 0
      %618 = vmatpush2.bf16.msra.mxu0 0
      %619 = vmatprep.subr.bf16.mxu0 0
      %620 = vmatpush2.bf16.msra.mxu0 0
      %621 = vmatprep.subr.bf16.mxu0 0
      %622 = vmatpush2.bf16.msra.mxu0 0
      %623 = vmatprep.subr.bf16.mxu0 0
      %624 = vmatpush2.bf16.msra.mxu0 0
      %625 = vmatprep.subr.bf16.mxu0 0
      %626 = vmatpush2.bf16.msra.mxu0 0
      %627 = vmatprep.subr.bf16.mxu0 0
      %628 = vmatpush2.bf16.msra.mxu0 0
      %629 = vmatprep.subr.bf16.mxu0 0
      %630 = vmatpush2.bf16.msra.mxu0 0
      %631 = vmatprep.mubr.bf16.mxu0 0
      %632 = vmatmul.mubr.bf16.gmra.mxu0 %v520
      %v633 = vpop.f32.mrf.mxu0
      %v634 = vadd.f32 %v549, %v633
      %v635 = vpop.f32.mrf.mxu0
      %v636 = vpop.f32.mrf.mxu0
      %v637 = vadd.f32 %v549, %v636
      %v638 = vpop.f32.mrf.mxu0
      %639 = vmatprep.mubr.bf16.mxu0 0
      %640 = vmatmul.mubr.bf16.gmra.mxu0 %v521
      %v641 = vpop.f32.mrf.mxu0
      %v642 = vadd.f32 %v549, %v641
      %v643 = vpop.f32.mrf.mxu0
      %v644 = vpop.f32.mrf.mxu0
      %v645 = vadd.f32 %v549, %v644
      %v646 = vpop.f32.mrf.mxu0
      %647 = vmatprep.mubr.bf16.mxu0 0
      %648 = vmatmul.mubr.bf16.gmra.mxu0 %v522
      %v649 = vpop.f32.mrf.mxu0
      %v650 = vadd.f32 %v549, %v649
      %v651 = vpop.f32.mrf.mxu0
      %v652 = vpop.f32.mrf.mxu0
      %v653 = vadd.f32 %v549, %v652
      %v654 = vpop.f32.mrf.mxu0
      %655 = vmatprep.mubr.bf16.mxu0 0
      %656 = vmatmul.mubr.bf16.gmra.mxu0 %v523
      %v657 = vpop.f32.mrf.mxu0
      %v658 = vadd.f32 %v549, %v657
      %v659 = vpop.f32.mrf.mxu0
      %v660 = vpop.f32.mrf.mxu0
      %v661 = vadd.f32 %v549, %v660
      %v662 = vpop.f32.mrf.mxu0
      %663 = vmatprep.mubr.bf16.mxu0 0
      %664 = vmatmul.mubr.bf16.gmra.mxu0 %v524
      %v665 = vpop.f32.mrf.mxu0
      %v666 = vadd.f32 %v549, %v665
      %v667 = vpop.f32.mrf.mxu0
      %v668 = vpop.f32.mrf.mxu0
      %v669 = vadd.f32 %v549, %v668
      %v670 = vpop.f32.mrf.mxu0
      %671 = vmatprep.mubr.bf16.mxu0 0
      %672 = vmatmul.mubr.bf16.gmra.mxu0 %v525
      %v673 = vpop.f32.mrf.mxu0
      %v674 = vadd.f32 %v549, %v673
      %v675 = vpop.f32.mrf.mxu0
      %v676 = vpop.f32.mrf.mxu0
      %v677 = vadd.f32 %v549, %v676
      %v678 = vpop.f32.mrf.mxu0
      %679 = vmatprep.mubr.bf16.mxu0 0
      %680 = vmatmul.mubr.bf16.gmra.mxu0 %v526
      %v681 = vpop.f32.mrf.mxu0
      %v682 = vadd.f32 %v549, %v681
      %v683 = vpop.f32.mrf.mxu0
      %v684 = vpop.f32.mrf.mxu0
      %v685 = vadd.f32 %v549, %v684
      %v686 = vpop.f32.mrf.mxu0
      %687 = vmatprep.mubr.bf16.mxu0 0
      %688 = vmatmul.mubr.bf16.gmra.mxu0 %v527
      %v689 = vpop.f32.mrf.mxu0
      %v690 = vadd.f32 %v549, %v689
      %v691 = vpop.f32.mrf.mxu0
      %v692 = vpop.f32.mrf.mxu0
      %v693 = vadd.f32 %v549, %v692
      %v694 = vpop.f32.mrf.mxu0
      %695 = vdwg.mxu0
      %v696 = vmax.f32 %v634, 0.0
      %v697 = vmax.f32 %v637, 0.0
      %v698 = vmax.f32 %v642, 0.0
      %v699 = vmax.f32 %v645, 0.0
      %v700 = vmax.f32 %v650, 0.0
      %v701 = vmax.f32 %v653, 0.0
      %v702 = vmax.f32 %v658, 0.0
      %v703 = vmax.f32 %v661, 0.0
      %v704 = vmax.f32 %v666, 0.0
      %v705 = vmax.f32 %v669, 0.0
      %v706 = vmax.f32 %v674, 0.0
      %v707 = vmax.f32 %v677, 0.0
      %v708 = vmax.f32 %v682, 0.0
      %v709 = vmax.f32 %v685, 0.0
      %v710 = vmax.f32 %v690, 0.0
      %v711 = vmax.f32 %v693, 0.0
      %v712 = vpack.c.bf16 %v697, %v696
      %v713 = vpack.c.bf16 %v699, %v698
      %v714 = vpack.c.bf16 %v701, %v700
      %v715 = vpack.c.bf16 %v703, %v702
      %v716 = vpack.c.bf16 %v705, %v704
      %v717 = vpack.c.bf16 %v707, %v706
      %v718 = vpack.c.bf16 %v709, %v708
      %v719 = vpack.c.bf16 %v711, %v710
      %v720 = vld [vmem:[%s5] sm:$0xf]
      %v721 = vld [vmem:[%s5 + $0x4] sm:$0xf]
      %v722 = vld [vmem:[%s5 + $0x8] sm:$0xf]
      %v723 = vld [vmem:[%s5 + $0xc] sm:$0xf]
      %v724 = vld [vmem:[%s5 + $0x10] sm:$0xf]
      %v725 = vld [vmem:[%s5 + $0x14] sm:$0xf]
      %v726 = vld [vmem:[%s5 + $0x18] sm:$0xf]
      %v727 = vld [vmem:[%s5 + $0x1c] sm:$0xf]
      %v728 = vld [vmem:[%s5 + $0x20] sm:$0xf]
      %v729 = vld [vmem:[%s5 + $0x24] sm:$0xf]
      %v730 = vld [vmem:[%s5 + $0x28] sm:$0xf]
      %v731 = vld [vmem:[%s5 + $0x2c] sm:$0xf]
      %v732 = vld [vmem:[%s5 + $0x30] sm:$0xf]
      %v733 = vld [vmem:[%s5 + $0x34] sm:$0xf]
      %v734 = vld [vmem:[%s5 + $0x38] sm:$0xf]
      %v735 = vld [vmem:[%s5 + $0x3c] sm:$0xf]
      %v736 = vld [vmem:[%s6] sm:$0x1]
      %v738 = vlaneseq
      %v739 = vshrl.u32 %v738, 7
      %v740 = vsub.s32 0, %v739
      %v741 = vrot.slane %v736, %v740
      %v759 = vunpack.c.l.b16 %v720
      %v760 = vunpack.c.l.b16 %v721
      %v761 = vunpack.c.l.b16 %v722
      %v762 = vunpack.c.l.b16 %v723
      %v763 = vunpack.c.l.b16 %v724
      %v764 = vunpack.c.l.b16 %v725
      %v765 = vunpack.c.l.b16 %v726
      %v766 = vunpack.c.l.b16 %v727
      %v767 = vunpack.c.l.b16 %v728
      %v768 = vunpack.c.l.b16 %v729
      %v769 = vunpack.c.l.b16 %v730
      %v770 = vunpack.c.l.b16 %v731
      %v771 = vunpack.c.l.b16 %v732
      %v772 = vunpack.c.l.b16 %v733
      %v773 = vunpack.c.l.b16 %v734
      %v774 = vunpack.c.l.b16 %v735
      %v775 = vpack.c.b16 %v760, %v759
      %v776 = vpack.c.b16 %v762, %v761
      %v777 = vpack.c.b16 %v764, %v763
      %v778 = vpack.c.b16 %v766, %v765
      %v779 = vpack.c.b16 %v768, %v767
      %v780 = vpack.c.b16 %v770, %v769
      %v781 = vpack.c.b16 %v772, %v771
      %v782 = vpack.c.b16 %v774, %v773
      %791 = vmatprep.subr.bf16.mxu0 0
      %792 = vmatpush1.bf16.msra.mxu0 %v782
      %793 = vmatprep.subr.bf16.mxu0 0
      %794 = vmatpush1.bf16.msra.mxu0 %v781
      %795 = vmatprep.subr.bf16.mxu0 0
      %796 = vmatpush1.bf16.msra.mxu0 %v780
      %797 = vmatprep.subr.bf16.mxu0 0
      %798 = vmatpush1.bf16.msra.mxu0 %v779
      %799 = vmatprep.subr.bf16.mxu0 0
      %800 = vmatpush1.bf16.msra.mxu0 %v778
      %801 = vmatprep.subr.bf16.mxu0 0
      %802 = vmatpush1.bf16.msra.mxu0 %v777
      %803 = vmatprep.subr.bf16.mxu0 0
      %804 = vmatpush1.bf16.msra.mxu0 %v776
      %805 = vmatprep.subr.bf16.mxu0 0
      %806 = vmatpush1.bf16.msra.mxu0 %v775
      %807 = vmatprep.subr.bf16.mxu0 0
      %808 = vmatpush2.bf16.msra.mxu0 0
      %809 = vmatprep.subr.bf16.mxu0 0
      %810 = vmatpush2.bf16.msra.mxu0 0
      %811 = vmatprep.subr.bf16.mxu0 0
      %812 = vmatpush2.bf16.msra.mxu0 0
      %813 = vmatprep.subr.bf16.mxu0 0
      %814 = vmatpush2.bf16.msra.mxu0 0
      %815 = vmatprep.subr.bf16.mxu0 0
      %816 = vmatpush2.bf16.msra.mxu0 0
      %817 = vmatprep.subr.bf16.mxu0 0
      %818 = vmatpush2.bf16.msra.mxu0 0
      %819 = vmatprep.subr.bf16.mxu0 0
      %820 = vmatpush2.bf16.msra.mxu0 0
      %821 = vmatprep.subr.bf16.mxu0 0
      %822 = vmatpush2.bf16.msra.mxu0 0
      %823 = vmatprep.mubr.bf16.mxu0 0
      %824 = vmatmul.mubr.bf16.gmra.mxu0 %v712
      %v825 = vpop.f32.mrf.mxu0
      %v826 = vadd.f32 %v741, %v825
      %v827 = vpop.f32.mrf.mxu0
      %v828 = vpop.f32.mrf.mxu0
      %v829 = vadd.f32 %v741, %v828
      %v830 = vpop.f32.mrf.mxu0
      %831 = vmatprep.mubr.bf16.mxu0 0
      %832 = vmatmul.mubr.bf16.gmra.mxu0 %v713
      %v833 = vpop.f32.mrf.mxu0
      %v834 = vadd.f32 %v741, %v833
      %v835 = vpop.f32.mrf.mxu0
      %v836 = vpop.f32.mrf.mxu0
      %v837 = vadd.f32 %v741, %v836
      %v838 = vpop.f32.mrf.mxu0
      %839 = vmatprep.mubr.bf16.mxu0 0
      %840 = vmatmul.mubr.bf16.gmra.mxu0 %v714
      %v841 = vpop.f32.mrf.mxu0
      %v842 = vadd.f32 %v741, %v841
      %v843 = vpop.f32.mrf.mxu0
      %v844 = vpop.f32.mrf.mxu0
      %v845 = vadd.f32 %v741, %v844
      %v846 = vpop.f32.mrf.mxu0
      %847 = vmatprep.mubr.bf16.mxu0 0
      %848 = vmatmul.mubr.bf16.gmra.mxu0 %v715
      %v849 = vpop.f32.mrf.mxu0
      %v850 = vadd.f32 %v741, %v849
      %v851 = vpop.f32.mrf.mxu0
      %v852 = vpop.f32.mrf.mxu0
      %v853 = vadd.f32 %v741, %v852
      %v854 = vpop.f32.mrf.mxu0
      %855 = vmatprep.mubr.bf16.mxu0 0
      %856 = vmatmul.mubr.bf16.gmra.mxu0 %v716
      %v857 = vpop.f32.mrf.mxu0
      %v858 = vadd.f32 %v741, %v857
      %v859 = vpop.f32.mrf.mxu0
      %v860 = vpop.f32.mrf.mxu0
      %v861 = vadd.f32 %v741, %v860
      %v862 = vpop.f32.mrf.mxu0
      %863 = vmatprep.mubr.bf16.mxu0 0
      %864 = vmatmul.mubr.bf16.gmra.mxu0 %v717
      %v865 = vpop.f32.mrf.mxu0
      %v866 = vadd.f32 %v741, %v865
      %v867 = vpop.f32.mrf.mxu0
      %v868 = vpop.f32.mrf.mxu0
      %v869 = vadd.f32 %v741, %v868
      %v870 = vpop.f32.mrf.mxu0
      %871 = vmatprep.mubr.bf16.mxu0 0
      %872 = vmatmul.mubr.bf16.gmra.mxu0 %v718
      %v873 = vpop.f32.mrf.mxu0
      %v874 = vadd.f32 %v741, %v873
      %v875 = vpop.f32.mrf.mxu0
      %v876 = vpop.f32.mrf.mxu0
      %v877 = vadd.f32 %v741, %v876
      %v878 = vpop.f32.mrf.mxu0
      %879 = vmatprep.mubr.bf16.mxu0 0
      %880 = vmatmul.mubr.bf16.gmra.mxu0 %v719
      %v881 = vpop.f32.mrf.mxu0
      %v882 = vadd.f32 %v741, %v881
      %v883 = vpop.f32.mrf.mxu0
      %v884 = vpop.f32.mrf.mxu0
      %v885 = vadd.f32 %v741, %v884
      %v886 = vpop.f32.mrf.mxu0
      %887 = vdwg.mxu0
      %v888 = vpack.c.bf16 %v829, %v826
      %v889 = vpack.c.bf16 %v837, %v834
      %v890 = vpack.c.bf16 %v845, %v842
      %v891 = vpack.c.bf16 %v853, %v850
      %v892 = vpack.c.bf16 %v861, %v858
      %v893 = vpack.c.bf16 %v869, %v866
      %v894 = vpack.c.bf16 %v877, %v874
      %v895 = vpack.c.bf16 %v885, %v882
      %v904 = vunpack.c.l.b16 %v888
      %v905 = vunpack.c.h.b16 %v888
      %v906 = vunpack.c.l.b16 %v889
      %v907 = vunpack.c.h.b16 %v889
      %v908 = vunpack.c.l.b16 %v890
      %v909 = vunpack.c.h.b16 %v890
      %v910 = vunpack.c.l.b16 %v891
      %v911 = vunpack.c.h.b16 %v891
      %v912 = vunpack.c.l.b16 %v892
      %v913 = vunpack.c.h.b16 %v892
      %v914 = vunpack.c.l.b16 %v893
      %v915 = vunpack.c.h.b16 %v893
      %v916 = vunpack.c.l.b16 %v894
      %v917 = vunpack.c.h.b16 %v894
      %v918 = vunpack.c.l.b16 %v895
      %v919 = vunpack.c.h.b16 %v895
      %v920 = vpack.c.b16 %v904, %v904
      %v921 = vpack.c.b16 %v905, %v905
      %v922 = vpack.c.b16 %v906, %v906
      %v923 = vpack.c.b16 %v907, %v907
      %v924 = vpack.c.b16 %v908, %v908
      %v925 = vpack.c.b16 %v909, %v909
      %v926 = vpack.c.b16 %v910, %v910
      %v927 = vpack.c.b16 %v911, %v911
      %v928 = vpack.c.b16 %v912, %v912
      %v929 = vpack.c.b16 %v913, %v913
      %v930 = vpack.c.b16 %v914, %v914
      %v931 = vpack.c.b16 %v915, %v915
      %v932 = vpack.c.b16 %v916, %v916
      %v933 = vpack.c.b16 %v917, %v917
      %v934 = vpack.c.b16 %v918, %v918
      %v935 = vpack.c.b16 %v919, %v919
      %952 = vst [vmem:[%s280] sm:$0xf] %v920
      %953 = vst [vmem:[%s280 + $0x4] sm:$0xf] %v921
      %954 = vst [vmem:[%s280 + $0x8] sm:$0xf] %v922
      %955 = vst [vmem:[%s280 + $0xc] sm:$0xf] %v923
      %956 = vst [vmem:[%s280 + $0x10] sm:$0xf] %v924
      %957 = vst [vmem:[%s280 + $0x14] sm:$0xf] %v925
      %958 = vst [vmem:[%s280 + $0x18] sm:$0xf] %v926
      %959 = vst [vmem:[%s280 + $0x1c] sm:$0xf] %v927
      %960 = vst [vmem:[%s280 + $0x20] sm:$0xf] %v928
      %961 = vst [vmem:[%s280 + $0x24] sm:$0xf] %v929
      %962 = vst [vmem:[%s280 + $0x28] sm:$0xf] %v930
      %963 = vst [vmem:[%s280 + $0x2c] sm:$0xf] %v931
      %964 = vst [vmem:[%s280 + $0x30] sm:$0xf] %v932
      %965 = vst [vmem:[%s280 + $0x34] sm:$0xf] %v933
      %966 = vst [vmem:[%s280 + $0x38] sm:$0xf] %v934
      %967 = vst [vmem:[%s280 + $0x3c] sm:$0xf] %v935
      %s968 = smul.u32 16, %s18
      %p969 = scmp.lt.s32.totalorder %s968, 31
      %s970 = scalar_select %p969, %s968, 31
      %s971 = smul.addr %s970, 4
      %s972 = scalar_lea.vmem %s7, %s971
      // Predicated region
      $region49: #{net_receiver_package_forward.1} parent=47 // pred_check
        %p973 = pneg %p188
      $region50: #{net_receiver_package_forward.1} parent=47 // pred_check_branch
        %975 = sbr.rel (%p973) target = $region52
      $region51: #{net_receiver_package_forward.1} parent=47 // pred_region
        %s976 = smul.u32 16, %s18
      $region52: #{net_receiver_package_forward.1} parent=47 // pred_fallthru
        _
    $region48: #{net_receiver_package_forward.1} parent=5 // pred_fallthru
      _
    %p977 = scmp.le.s32.totalorder 2, %s13
    // Predicated region
    $region53: #{net_receiver_package_forward.1} parent=5 // pred_check
      %p978 = pneg %p977
    $region54: #{net_receiver_package_forward.1} parent=5 // pred_check_branch
      %980 = sbr.rel (%p978) target = $region56
    $region55: #{net_receiver_package_forward.1} parent=5 // pred_region
      %s981 = ssub.s32 %s13, 2
      // Predicated region
      $region57: #{net_receiver_package_forward.1} parent=55 // pred_check
        %p982 = pneg %p194
      $region58: #{net_receiver_package_forward.1} parent=55 // pred_check_branch
        %984 = sbr.rel (%p982) target = $region60
      $region59: #{net_receiver_package_forward.1} parent=55 // pred_region
        %s985 = smul.u32 16, %s19
        %p986 = scmp.lt.s32.totalorder %s985, 31
        %s987 = scalar_select %p986, %s985, 31
        %s988 = smul.addr %s987, 4
        %s989 = scalar_lea.vmem %s7, %s988
      $region60: #{net_receiver_package_forward.1} parent=55 // pred_fallthru
        _
    $region56: #{net_receiver_package_forward.1} parent=5 // pred_fallthru
      _
  $region6: #{net_receiver_package_forward.1} parent=0 // loop_footer
    %s17 = sadd.s32 1, %s13
  $region7: #{net_receiver_package_forward.1} parent=0 // loop_footer_branch
    %12 = sbr.rel target = $region3
  $region8: #{net_receiver_package_forward.1} parent=0 // loop_exit
    _

</llo_original>
